<compile_context>
chip_gen: v5e
topology: v5e:2x2
jax: 0.10.0
libtpu: 0.0.40
codegen_flags: <defaults>
</compile_context>

<pallas_src>
import jax
import jax.numpy as jnp
from jax.experimental import pallas as pl
from jax.experimental.pallas import tpu as pltpu


def _round_up(x, m):
    return (x + m - 1) // m * m


def node_apply_kernel(x_ref, w_ref, b_ref, o_ref):
    # x_ref: (tn, in_feats)  w_ref: (in_feats, out_p)  b_ref: (1, out_p)  o_ref: (tn, out_p)
    h = jnp.dot(x_ref[...], w_ref[...], preferred_element_type=jnp.float32)
    h = h + b_ref[...].astype(jnp.float32)   # bias-add + ReLU in f32, cast once at store
    h = jnp.maximum(h, 0.0)                  # activation = F.relu
    o_ref[...] = h.astype(o_ref.dtype)


def node_apply(x, w, b, *, tn=None, vmem_budget_bytes=48 * 1024 * 1024):
    """x: (N, in_feats), w: (in_feats, out_feats), b: (out_feats,) -> (N, out_feats)."""
    N, in_feats = x.shape
    assert w.shape[0] == in_feats
    out_feats = w.shape[1]

    # Lane-dense output: pad out_feats to a multiple of 128 so stores are full `vst`,
    # not masked `vst.msk` (biggest measured store-side lever, esp. v5e's single vst slot).
    out_p = _round_up(out_feats, 128)

    # Tile selection: biggest node tile fitting the VMEM budget (amortizes ~0.35us/step
    # pipeline overhead on a mem-bound kernel), capped at ~N/2 so both v7x TensorCores
    # get work when N is small.
    if tn is None:
        resident = 2 * (in_feats * out_p + out_p) * 4     # weight + bias, 2-buffer worst case
        tn = 8
        for cand in (1024, 768, 512, 384, 256, 128, 64, 32, 16, 8):
            if resident + 2 * cand * (in_feats + out_p) * 4 <= vmem_budget_bytes:
                tn = cand
                break
        if N > 8:
            tn = min(tn, _round_up(pl.cdiv(N, 2), 8))
    tn = max(8, _round_up(tn, 8))

    # Pad the (small) weight / bias columns only if out_feats isn't lane-aligned.
    w_p = w if out_p == out_feats else jnp.pad(w, ((0, 0), (0, out_p - out_feats)))
    b_p = (b if out_p == out_feats else jnp.pad(b, (0, out_p - out_feats))).reshape(1, out_p)

    # Ragged N: rely on Pallas partial-last-block clipping (no HBM copy of x needed).
    grid = (pl.cdiv(N, tn),)

    # Explicit scoped-VMEM limit sized to the actual footprint (+ slack); unlocks big tiles
    # without relying on the 16/32 MiB default, stays under v7x's 64 MiB physical VMEM.
    need = (2 * tn * (in_feats + out_p) + 2 * in_feats * out_p + 4 * out_p) * 4
    vmem_limit = int(min(max(need + (8 << 20), 32 << 20), 56 << 20))

    # TODO(synk): if 2*in_feats*out_p*4 itself outgrows the VMEM budget, split in_feats
    # onto a trailing "arbitrary" grid axis with a VMEM f32 accumulator instead of
    # keeping the weight fully resident.

    cost = pl.CostEstimate(
        flops=2 * N * in_feats * out_p,
        transcendentals=0,
        bytes_accessed=4 * (N * in_feats + in_feats * out_p + N * out_p),
    )

    out_padded = pl.pallas_call(
        node_apply_kernel,
        out_shape=jax.ShapeDtypeStruct((N, out_p), x.dtype),
        grid_spec=pltpu.PrefetchScalarGridSpec(
            num_scalar_prefetch=0,
            grid=grid,
            in_specs=[
                pl.BlockSpec((tn, in_feats), lambda i: (i, 0)),
                pl.BlockSpec((in_feats, out_p), lambda i: (0, 0)),
                pl.BlockSpec((1, out_p), lambda i: (0, 0)),
            ],
            out_specs=pl.BlockSpec((tn, out_p), lambda i: (i, 0)),
        ),
        compiler_params=pltpu.CompilerParams(
            dimension_semantics=("parallel",),
            vmem_limit_bytes=vmem_limit,
        ),
        cost_estimate=cost,
    )(x, w_p, b_p)

    return out_padded if out_p == out_feats else out_padded[:, :out_feats]


if __name__ == "__main__":
    # Small, deterministic synthetic setup consistent with NodeApplyModule(in_feats, out_feats, F.relu)
    key = jax.random.PRNGKey(0)
    kx, kw, kb = jax.random.split(key, 3)

    N, in_feats, out_feats = 128, 32, 64
    x = jax.random.normal(kx, (N, in_feats), dtype=jnp.float32)
    # Deterministic "Linear" params (synthetic, not loaded from a checkpoint)
    w = jax.random.normal(kw, (in_feats, out_feats), dtype=jnp.float32) * (1.0 / in_feats ** 0.5)
    b = jax.random.normal(kb, (out_feats,), dtype=jnp.float32) * 0.1

    out = jax.block_until_ready(node_apply(x, w, b))
    ref = jnp.maximum(x @ w + b[None, :], 0.0)
    assert out.shape == (N, out_feats)
    assert jnp.allclose(out, ref, atol=1e-5, rtol=1e-5), "mismatch vs reference"

    # Ragged node count (exercises the partial-last-block path, no explicit padding)
    out2 = jax.block_until_ready(node_apply(x[:100], w, b))
    ref2 = jnp.maximum(x[:100] @ w + b[None, :], 0.0)
    assert out2.shape == (100, out_feats)
    assert jnp.allclose(out2, ref2, atol=1e-5, rtol=1e-5), "ragged mismatch vs reference"

    print("KERNEL_OK")
</pallas_src>

<mosaic_0001>
module attributes {stable_mosaic.version = 11 : i64} {
  func.func @node_apply_kernel(%arg0: i32, %arg1: memref<64x32xf32, #tpu.memory_space<vmem>>, %arg2: memref<32x128xf32, #tpu.memory_space<vmem>>, %arg3: memref<1x128xf32, #tpu.memory_space<vmem>>, %arg4: memref<64x128xf32, #tpu.memory_space<vmem>>) attributes {dimension_semantics = [#tpu.dimension_semantics<parallel>], iteration_bounds = array<i64: 2>, scalar_prefetch = 0 : i64, scratch_operands = 0 : i64, tpu.core_type = #tpu.core_type<tc>, window_params = [{transform_indices = @transform_0, window_bounds = array<i64: 64, 32>}, {pipeline_mode = #tpu.pipeline_mode<synchronous>, transform_indices = @transform_1, window_bounds = array<i64: 32, 128>}, {pipeline_mode = #tpu.pipeline_mode<synchronous>, transform_indices = @transform_2, window_bounds = array<i64: 1, 128>}, {transform_indices = @transform_3, window_bounds = array<i64: 64, 128>}]} {
    %c0 = arith.constant 0 : index
    %c0_0 = arith.constant 0 : index
    %0 = vector.load %arg1[%c0, %c0_0] : memref<64x32xf32, #tpu.memory_space<vmem>>, vector<64x32xf32>
    %c0_1 = arith.constant 0 : index
    %c0_2 = arith.constant 0 : index
    %1 = vector.load %arg2[%c0_1, %c0_2] : memref<32x128xf32, #tpu.memory_space<vmem>>, vector<32x128xf32>
    %cst = arith.constant dense<0.000000e+00> : vector<64x128xf32>
    %2 = tpu.matmul %0, %1, %cst {dimension_numbers = #tpu.dot_dimension_numbers<[1], [0], [0], [1], [0, 0, 1, 1], [], []>} : vector<64x32xf32>, vector<32x128xf32>, vector<64x128xf32> -> vector<64x128xf32>
    %c0_3 = arith.constant 0 : index
    %c0_4 = arith.constant 0 : index
    %3 = vector.load %arg3[%c0_3, %c0_4] : memref<1x128xf32, #tpu.memory_space<vmem>>, vector<1x128xf32>
    %4 = vector.broadcast %3 : vector<1x128xf32> to vector<64x128xf32>
    %5 = arith.addf %2, %4 : vector<64x128xf32>
    %cst_5 = arith.constant 0.000000e+00 : f32
    %6 = vector.broadcast %cst_5 : f32 to vector<64x128xf32>
    %7 = arith.maximumf %5, %6 : vector<64x128xf32>
    %c0_6 = arith.constant 0 : index
    %c0_7 = arith.constant 0 : index
    %8 = vector.load %arg4[%c0_6, %c0_7] : memref<64x128xf32, #tpu.memory_space<vmem>>, vector<64x128xf32>
    tpu.vector_store %arg4[%c0_6, %c0_7], %7 {strides = array<i32>} : memref<64x128xf32, #tpu.memory_space<vmem>>, vector<64x128xf32>,
    return
  }
  func.func @transform_0(%arg0: i32) -> (i32, i32) {
    %c0_i32 = arith.constant 0 : i32
    %c0_i32_0 = arith.constant 0 : i32
    return %arg0, %c0_i32 : i32, i32
  }
  func.func @transform_1(%arg0: i32) -> (i32, i32) {
    %c0_i32 = arith.constant 0 : i32
    %c0_i32_0 = arith.constant 0 : i32
    %c0_i32_1 = arith.constant 0 : i32
    return %c0_i32, %c0_i32_0 : i32, i32
  }
  func.func @transform_2(%arg0: i32) -> (i32, i32) {
    %c0_i32 = arith.constant 0 : i32
    %c0_i32_0 = arith.constant 0 : i32
    %c0_i32_1 = arith.constant 0 : i32
    return %c0_i32, %c0_i32_0 : i32, i32
  }
  func.func @transform_3(%arg0: i32) -> (i32, i32) {
    %c0_i32 = arith.constant 0 : i32
    %c0_i32_0 = arith.constant 0 : i32
    return %arg0, %c0_i32 : i32, i32
  }
}

</mosaic_0001>

<llo_original>
// kernel: tpu_custom_call.1
$region0: #{tpu_custom_call.1}
  #allocation0 [shape = 'u32[]', space=smem, size = 0x4, offset = 0x4, fixed_abs, tag = 'smem constant byte address 0x4 - core index']
  #allocation1 [shape = 'u32[72,128]{1,0:T(1,128)}', space=vmem, size = 0x9000, scoped, tag = 'internal scratch']
  %s0 = inlined_call_operand.vmem [shape: f32[128,32], index: 0, kind: input, shape index: {}]
  %s1 = inlined_call_operand.vmem [shape: f32[32,128], index: 1, kind: input, shape index: {}]
  %s2 = inlined_call_operand.vmem [shape: f32[1,128], index: 2, kind: input, shape index: {}]
  %s3 = inlined_call_operand.hbm [shape: f32[128,128], index: 3, kind: output, shape index: {}]
  %s4 = sld [smem:[#allocation0]]
  $region45: #{tpu_custom_call.1} parent=0
    _
  %s6 = ssub.s32 1, %s4
  %s7 = scalar_select 0, %s6, %s4
  $region1: #{tpu_custom_call.1} parent=0
    #allocation2 [shape = 'u8[65536]{0}', space=vmem, size = 0x10000, scoped, tag = 'output window, operand 0']
    #allocation3 [shape = 's32[2]{0}', space=sflag, size = 0x8, scoped, tag = 'scoped memory for tpu_custom_call.1']
    %8 = vsyncpa [#allocation3], 0
    %s9 = scalar_lea.sflag [#allocation3], 1
    %10 = vsyncpa %s9, 0
    loop: start=0, step=1, limit=4
    $region2: #{tpu_custom_call.1} parent=1 // loop_pre_header
      _
    $region3: #{tpu_custom_call.1} parent=1 // loop_header
      %s12 = sphi 0, %s16
      %p13 = scmp.ge.s32.totalorder %s12, 4
      %s22 = sphi 0, %s24
      %s25 = sphi 0, %s22
      %s26 = sphi 0, %s25
      %s42 = sphi 0, %s26
      %s46 = sphi 0, %s46
      %s48 = sphi 0, %s46
      %s49 = sphi 0, %s48
      %s63 = sphi 0, %s49
      %s67 = sphi 0, %s67
      %s69 = sphi 0, %s67
      %s70 = sphi 0, %s69
      %s84 = sphi 0, %s70
      %s90 = sphi 0, %s92
      %s93 = sphi 0, %s90
      %s94 = sphi 0, %s93
      %s110 = sphi 0, %s94
    $region4: #{tpu_custom_call.1} parent=1 // loop_header_branch
      %15 = sbr.rel (%p13) target = $region8
    $region5: #{tpu_custom_call.1} parent=1 // loop_body
      %s17 = ssub.s32 %s12, 1
      %s18 = ssub.s32 %s12, 2
      %s19 = sadd.s32 %s12, 1
      %s20 = ssub.s32 %s12, %s19
      %p21 = scmp.eq.s32.totalorder %s20, 0
      %s23 = sadd.s32 %s22, 1
      %s24 = scalar_select %p21, %s22, %s23
      %p27 = pneg %p21
      %p28 = scmp.eq.s32.totalorder %s12, 1
      %p29 = por %p27, %p28
      %p30 = scmp.ne.s32.totalorder %s22, %s25
      %p31 = scmp.eq.s32.totalorder %s12, 0
      %p32 = por %p30, %p31
      %p33 = scmp.ne.s32.totalorder %s22, %s25
      %p34 = scmp.eq.s32.totalorder %s17, 1
      %p35 = por %p33, %p34
      %p36 = scmp.ne.s32.totalorder %s25, %s26
      %p37 = scmp.eq.s32.totalorder %s17, 0
      %p38 = por %p36, %p37
      %p39 = scmp.ne.s32.totalorder %s25, %s26
      %p40 = scmp.eq.s32.totalorder %s18, 1
      %p41 = por %p39, %p40
      %p43 = scmp.ne.s32.totalorder %s26, %s42
      %p44 = scmp.eq.s32.totalorder %s18, 0
      %p45 = por %p43, %p44
      %s47 = sadd.s32 %s46, 1
      %p50 = scmp.eq.s32.totalorder %s12, 1
      %p51 = scmp.ne.s32.totalorder %s46, %s48
      %p52 = scmp.eq.s32.totalorder %s12, 0
      %p53 = por %p51, %p52
      %p54 = scmp.ne.s32.totalorder %s46, %s48
      %p55 = scmp.eq.s32.totalorder %s17, 1
      %p56 = por %p54, %p55
      %p57 = scmp.ne.s32.totalorder %s48, %s49
      %p58 = scmp.eq.s32.totalorder %s17, 0
      %p59 = por %p57, %p58
      %p60 = scmp.ne.s32.totalorder %s48, %s49
      %p61 = scmp.eq.s32.totalorder %s18, 1
      %p62 = por %p60, %p61
      %p64 = scmp.ne.s32.totalorder %s49, %s63
      %p65 = scmp.eq.s32.totalorder %s18, 0
      %p66 = por %p64, %p65
      %s68 = sadd.s32 %s67, 1
      %p71 = scmp.eq.s32.totalorder %s12, 1
      %p72 = scmp.ne.s32.totalorder %s67, %s69
      %p73 = scmp.eq.s32.totalorder %s12, 0
      %p74 = por %p72, %p73
      %p75 = scmp.ne.s32.totalorder %s67, %s69
      %p76 = scmp.eq.s32.totalorder %s17, 1
      %p77 = por %p75, %p76
      %p78 = scmp.ne.s32.totalorder %s69, %s70
      %p79 = scmp.eq.s32.totalorder %s17, 0
      %p80 = por %p78, %p79
      %p81 = scmp.ne.s32.totalorder %s69, %s70
      %p82 = scmp.eq.s32.totalorder %s18, 1
      %p83 = por %p81, %p82
      %p85 = scmp.ne.s32.totalorder %s70, %s84
      %p86 = scmp.eq.s32.totalorder %s18, 0
      %p87 = por %p85, %p86
      %s88 = ssub.s32 %s12, %s19
      %p89 = scmp.eq.s32.totalorder %s88, 0
      %s91 = sadd.s32 %s90, 1
      %s92 = scalar_select %p89, %s90, %s91
      %p95 = pneg %p89
      %p96 = scmp.eq.s32.totalorder %s12, 1
      %p97 = por %p95, %p96
      %p98 = scmp.ne.s32.totalorder %s90, %s93
      %p99 = scmp.eq.s32.totalorder %s12, 0
      %p100 = por %p98, %p99
      %p101 = scmp.ne.s32.totalorder %s90, %s93
      %p102 = scmp.eq.s32.totalorder %s17, 1
      %p103 = por %p101, %p102
      %p104 = scmp.ne.s32.totalorder %s93, %s94
      %p105 = scmp.eq.s32.totalorder %s17, 0
      %p106 = por %p104, %p105
      %p107 = scmp.ne.s32.totalorder %s93, %s94
      %p108 = scmp.eq.s32.totalorder %s18, 1
      %p109 = por %p107, %p108
      %p111 = scmp.ne.s32.totalorder %s94, %s110
      %p112 = scmp.eq.s32.totalorder %s18, 0
      %p113 = por %p111, %p112
      %p114 = scmp.le.s32.totalorder 1, %s12
      %p115 = scmp.lt.s32.totalorder %s12, 3
      %p116 = pnand %p114, %p115
      %p117 = pneg %p116
      // Predicated region
      $region9: #{tpu_custom_call.1} parent=5 // pred_check
        _
      $region10: #{tpu_custom_call.1} parent=5 // pred_check_branch
        %119 = sbr.rel (%p116) target = $region12
      $region11: #{tpu_custom_call.1} parent=5 // pred_region
        %s120 = ssub.s32 %s12, 1
        // Predicated region
        $region13: #{tpu_custom_call.1} parent=11 // pred_check
          %p121 = pneg %p59
        $region14: #{tpu_custom_call.1} parent=11 // pred_check_branch
          %123 = sbr.rel (%p121) target = $region16
        $region15: #{tpu_custom_call.1} parent=11 // pred_region
          _
        $region16: #{tpu_custom_call.1} parent=11 // pred_fallthru
          _
        // Predicated region
        $region17: #{tpu_custom_call.1} parent=11 // pred_check
          %p124 = pneg %p80
        $region18: #{tpu_custom_call.1} parent=11 // pred_check_branch
          %126 = sbr.rel (%p124) target = $region20
        $region19: #{tpu_custom_call.1} parent=11 // pred_region
          _
        $region20: #{tpu_custom_call.1} parent=11 // pred_fallthru
          _
      $region12: #{tpu_custom_call.1} parent=5 // pred_fallthru
        _
      %p127 = scmp.lt.s32.totalorder %s12, 2
      // Predicated region
      $region21: #{tpu_custom_call.1} parent=5 // pred_check
        %p128 = pneg %p127
      $region22: #{tpu_custom_call.1} parent=5 // pred_check_branch
        %130 = sbr.rel (%p128) target = $region24
      $region23: #{tpu_custom_call.1} parent=5 // pred_region
        // Predicated region
        $region25: #{tpu_custom_call.1} parent=23 // pred_check
          %p131 = pneg %p32
        $region26: #{tpu_custom_call.1} parent=23 // pred_check_branch
          %133 = sbr.rel (%p131) target = $region28
        $region27: #{tpu_custom_call.1} parent=23 // pred_region
          %s134 = smul.u32 8, %s12
          %p135 = scmp.lt.s32.totalorder %s134, 15
          %s136 = scalar_select %p135, %s134, 15
          %s137 = smul.addr %s136, 8
          %s138 = scalar_lea.vmem %s0, %s137
          %s139 = smul.u32 8, %s12
        $region28: #{tpu_custom_call.1} parent=23 // pred_fallthru
          _
      $region24: #{tpu_custom_call.1} parent=5 // pred_fallthru
        _
      %p140 = scmp.le.s32.totalorder 1, %s12
      %p141 = scmp.lt.s32.totalorder %s12, 3
      %p142 = pnand %p140, %p141
      %p143 = pneg %p142
      // Predicated region
      $region29: #{tpu_custom_call.1} parent=5 // pred_check
        _
      $region30: #{tpu_custom_call.1} parent=5 // pred_check_branch
        %145 = sbr.rel (%p142) target = $region32
      $region31: #{tpu_custom_call.1} parent=5 // pred_region
        %s146 = ssub.s32 %s12, 1
        %s147 = smul.u32 8, %s17
        %p148 = scmp.lt.s32.totalorder %s147, 15
        %s149 = scalar_select %p148, %s147, 15
        %s150 = smul.addr %s149, 8
        %s151 = scalar_lea.vmem %s0, %s150
        %p152 = pneg %p38
        %p153 = pneg %p35
        %p154 = pneg %p59
        %p155 = pneg %p56
        %p156 = pneg %p80
        %p157 = pneg %p77
        %p158 = pneg %p106
        %p159 = pneg %p103
        %s160 = sand.u32 %s93, 1
        %s161 = scalar_lea.sflag [#allocation3], %s160
        %s162 = sand.u32 %s93, 1
        %s163 = smul.addr %s162, 64
        %s164 = scalar_lea.vmem [#allocation2], %s163
        %s165 = smul.u32 8, %s17
        %p166 = scmp.lt.s32.totalorder %s165, 15
        %s167 = scalar_select %p166, %s165, 15
        %s168 = smul.addr %s167, 8
        %s169 = scalar_lea.vmem %s0, %s168
        %s170 = smul.u32 8, %s17
        %s171 = smul.u32 8, %s17
        %v172 = vld [vmem:[%s169] sm:$0xff]
        %v173 = vld [vmem:[%s169 + $0x8] sm:$0xff]
        %v174 = vld [vmem:[%s169 + $0x10] sm:$0xff]
        %v175 = vld [vmem:[%s169 + $0x18] sm:$0xff]
        %v176 = vld [vmem:[%s169 + $0x20] sm:$0xff]
        %v177 = vld [vmem:[%s169 + $0x28] sm:$0xff]
        %v178 = vld [vmem:[%s169 + $0x30] sm:$0xff]
        %v179 = vld [vmem:[%s169 + $0x38] sm:$0xff]
        %v180 = vld [vmem:[%s1] sm:$0xff]
        %v181 = vld [vmem:[%s1 + $0x8] sm:$0xff]
        %v182 = vld [vmem:[%s1 + $0x10] sm:$0xff]
        %v183 = vld [vmem:[%s1 + $0x18] sm:$0xff]
        %v184 = vld [vmem:[%s2] sm:$0x1]
        %v186 = vperm.slane %v184, 0
        %vm188 = vcmask 261120
        %v190 = vsel %vm188, %v172, 0
        %v193 = vsel %vm188, %v173, 0
        %v196 = vsel %vm188, %v174, 0
        %v199 = vsel %vm188, %v175, 0
        %v202 = vsel %vm188, %v176, 0
        %v205 = vsel %vm188, %v177, 0
        %v208 = vsel %vm188, %v178, 0
        %v211 = vsel %vm188, %v179, 0
        %213 = vmatpush.msra.mxu0 0.0
        %214 = vmatpush.msra.mxu0 0.0
        %215 = vmatpush.msra.mxu0 0.0
        %216 = vmatpush.msra.mxu0 0.0
        %217 = vmatpush.msra.mxu0 0.0
        %218 = vmatpush.msra.mxu0 0.0
        %219 = vmatpush.msra.mxu0 0.0
        %220 = vmatpush.msra.mxu0 0.0
        %221 = vmatpush.msra.mxu0 0.0
        %222 = vmatpush.msra.mxu0 0.0
        %223 = vmatpush.msra.mxu0 0.0
        %224 = vmatpush.msra.mxu0 0.0
        %225 = vmatpush.msra.mxu0 %v183
        %226 = vmatpush.msra.mxu0 %v182
        %227 = vmatpush.msra.mxu0 %v181
        %228 = vmatpush.msra.mxu0 %v180
        %229 = vmatmul.f32.gmra.mxu0 %v190
        %v230 = vpop.f32.mrf.mxu0
        %v231 = vadd.f32 %v186, %v230
        %232 = vmatmul.f32.gmra.mxu0 %v193
        %v233 = vpop.f32.mrf.mxu0
        %v234 = vadd.f32 %v186, %v233
        %235 = vmatmul.f32.gmra.mxu0 %v196
        %v236 = vpop.f32.mrf.mxu0
        %v237 = vadd.f32 %v186, %v236
        %238 = vmatmul.f32.gmra.mxu0 %v199
        %v239 = vpop.f32.mrf.mxu0
        %v240 = vadd.f32 %v186, %v239
        %241 = vmatmul.f32.gmra.mxu0 %v202
        %v242 = vpop.f32.mrf.mxu0
        %v243 = vadd.f32 %v186, %v242
        %244 = vmatmul.f32.gmra.mxu0 %v205
        %v245 = vpop.f32.mrf.mxu0
        %v246 = vadd.f32 %v186, %v245
        %247 = vmatmul.f32.gmra.mxu0 %v208
        %v248 = vpop.f32.mrf.mxu0
        %v249 = vadd.f32 %v186, %v248
        %250 = vmatmul.f32.gmra.mxu0 %v211
        %v251 = vpop.f32.mrf.mxu0
        %v252 = vadd.f32 %v186, %v251
        %253 = vdwg.mxu0
        %v254 = vmax.f32 %v231, 0.0
        %v255 = vmax.f32 %v234, 0.0
        %v256 = vmax.f32 %v237, 0.0
        %v257 = vmax.f32 %v240, 0.0
        %v258 = vmax.f32 %v243, 0.0
        %v259 = vmax.f32 %v246, 0.0
        %v260 = vmax.f32 %v249, 0.0
        %v261 = vmax.f32 %v252, 0.0
        %262 = vst [vmem:[%s164] sm:$0xff] %v254
        %263 = vst [vmem:[%s164 + $0x8] sm:$0xff] %v255
        %264 = vst [vmem:[%s164 + $0x10] sm:$0xff] %v256
        %265 = vst [vmem:[%s164 + $0x18] sm:$0xff] %v257
        %266 = vst [vmem:[%s164 + $0x20] sm:$0xff] %v258
        %267 = vst [vmem:[%s164 + $0x28] sm:$0xff] %v259
        %268 = vst [vmem:[%s164 + $0x30] sm:$0xff] %v260
        %269 = vst [vmem:[%s164 + $0x38] sm:$0xff] %v261
        %s270 = sand.u32 %s93, 1
        %s271 = scalar_lea.sflag [#allocation3], %s270
        %s272 = sand.u32 %s93, 1
        %s273 = smul.addr %s272, 64
        %s274 = scalar_lea.vmem [#allocation2], %s273
        // Predicated region
        $region33: #{tpu_custom_call.1} parent=31 // pred_check
          %p275 = pneg %p103
        $region34: #{tpu_custom_call.1} parent=31 // pred_check_branch
          %277 = sbr.rel (%p275) target = $region36
        $region35: #{tpu_custom_call.1} parent=31 // pred_region
          %s278 = smul.u32 8, %s17
          %280 = vsyncadd %s271, 0
          %s281 = smul.addr %s278, 8
          %s282 = scalar_lea.hbm %s3, %s281
          %s283 = sshll.u32 %s274, 4
          %s284 = int_to_ptr.vmem [resolvable:$true] %s283
          %s285 = sshll.u32 %s282, 4
          %s286 = int_to_ptr.hbm [resolvable:$true] %s285
          %291 = dma.vmem_to_hbm [thread:$0]  %s284, 1024, %s286, %s271, 128, 128, 8
        $region36: #{tpu_custom_call.1} parent=31 // pred_fallthru
          _
      $region32: #{tpu_custom_call.1} parent=5 // pred_fallthru
        _
      %p292 = scmp.le.s32.totalorder 2, %s12
      // Predicated region
      $region37: #{tpu_custom_call.1} parent=5 // pred_check
        %p293 = pneg %p292
      $region38: #{tpu_custom_call.1} parent=5 // pred_check_branch
        %295 = sbr.rel (%p293) target = $region40
      $region39: #{tpu_custom_call.1} parent=5 // pred_region
        %s296 = ssub.s32 %s12, 2
        // Predicated region
        $region41: #{tpu_custom_call.1} parent=39 // pred_check
          %p297 = pneg %p109
        $region42: #{tpu_custom_call.1} parent=39 // pred_check_branch
          %299 = sbr.rel (%p297) target = $region44
        $region43: #{tpu_custom_call.1} parent=39 // pred_region
          %s300 = sand.u32 %s94, 1
          %s301 = scalar_lea.sflag [#allocation3], %s300
          %s302 = sand.u32 %s94, 1
          %s303 = smul.addr %s302, 64
          %s304 = scalar_lea.vmem [#allocation2], %s303
          %306 = dma.done %s301, 1024
        $region44: #{tpu_custom_call.1} parent=39 // pred_fallthru
          _
      $region40: #{tpu_custom_call.1} parent=5 // pred_fallthru
        _
    $region6: #{tpu_custom_call.1} parent=1 // loop_footer
      %s16 = sadd.s32 1, %s12
    $region7: #{tpu_custom_call.1} parent=1 // loop_footer_branch
      %11 = sbr.rel target = $region3
    $region8: #{tpu_custom_call.1} parent=1 // loop_exit
      _
    %307 = vsyncpa [#allocation3], 1
    %s308 = scalar_lea.sflag [#allocation3], 1
    %309 = vsyncpa %s308, 1

</llo_original>
